<compile_context>
chip_gen: v5e
topology: v5e:2x2
jax: 0.10.0
libtpu: 0.0.40
codegen_flags: <defaults>
</compile_context>

<pallas_src>
import jax
import jax.numpy as jnp
from jax.experimental import pallas as pl
from jax.experimental.pallas import tpu as pltpu


def _round_up(n: int, m: int) -> int:
    return ((n + m - 1) // m) * m


def _svm_kernel(x_ref, w_ref, o_ref):
    # w: (1, F), x: (TB, F) -> contract over F -> (1, TB) lane-dense row.
    # No transpose/relayout of the weight; MXU result uses TB columns, not 1.
    o_ref[...] = jax.lax.dot_general(
        w_ref[...],
        x_ref[...],
        dimension_numbers=(((1,), (1,)), ((), ())),
        preferred_element_type=jnp.float32,
    ).astype(o_ref.dtype)


def _choose_batch_tile(batch: int, f_pad: int,
                       max_tile: int = 512,
                       vmem_budget_bytes: int = 24 * 1024 * 1024) -> int:
    """Largest batch tile that fits a double-buffered x tile in the VMEM budget."""
    rows_budget = max(8, vmem_budget_bytes // (2 * f_pad * 4))  # 2x f32 x-tiles
    if batch <= max_tile and batch <= rows_budget:
        # Single tile covers the whole (padded) batch.
        return _round_up(batch, 8)
    tb = min(max_tile, rows_budget)
    # Multi-tile: keep the output block lane-aligned (multiple of 128).
    return max(128, (tb // 128) * 128)


def svm_forward(x: jax.Array, weight: jax.Array) -> jax.Array:
    """Pallas implementation of SVM.forward: y = x @ weight.T (no bias).

    x:      (batch, n_features) float32
    weight: (1, n_features)     float32
    returns (batch, 1)          float32
    """
    B, F = x.shape
    assert weight.shape == (1, F)

    # Pad the feature (lane) axis to a multiple of 128; zeros contribute 0.
    F_pad = _round_up(F, 128)
    # TODO(synk): for very large n_features (>~4K) add a feature-axis grid with
    # a VMEM f32 accumulator instead of a single (TB, F_pad) tile.
    TB = _choose_batch_tile(B, F_pad)
    B_pad = _round_up(B, TB)

    x_p = jnp.pad(x, ((0, B_pad - B), (0, F_pad - F)))
    w_p = jnp.pad(weight, ((0, 0), (0, F_pad - F)))

    num_tiles = B_pad // TB

    out_row = pl.pallas_call(
        _svm_kernel,
        out_shape=jax.ShapeDtypeStruct((1, B_pad), x.dtype),
        grid_spec=pl.GridSpec(
            grid=(num_tiles,),
            in_specs=[
                # Streamed, double-buffered x tiles.
                pl.BlockSpec((TB, F_pad), lambda i: (i, 0)),
                # Weight stays resident (same block every step).
                pl.BlockSpec((1, F_pad), lambda i: (0, 0)),
            ],
            # Lane-dense output: one (1, TB) row per tile.
            out_specs=pl.BlockSpec((1, TB), lambda i: (0, i)),
        ),
        compiler_params=pltpu.CompilerParams(
            dimension_semantics=("parallel",),
        ),
    )(x_p, w_p)

    # (1, B_pad) -> (B, 1); free layout plumbing in the wrapper.
    return out_row[0, :B].reshape(B, 1)


if __name__ == "__main__":
    # Deterministic synthetic parameters / inputs (no checkpoint loading).
    key = jax.random.PRNGKey(0)
    k_x, k_w, k_x2, k_w2 = jax.random.split(key, 4)

    # Small shape matching the original module's usage.
    batch = 8
    n_features = 32

    x = jax.random.normal(k_x, (batch, n_features), dtype=jnp.float32)
    # Mimic nn.Linear default init: U(-1/sqrt(F), 1/sqrt(F)), deterministic here.
    bound = 1.0 / (n_features ** 0.5)
    weight = jax.random.uniform(
        k_w, (1, n_features), minval=-bound, maxval=bound, dtype=jnp.float32
    )

    out = svm_forward(x, weight)
    jax.block_until_ready(out)

    ref = x @ weight.T
    assert out.shape == (batch, 1)
    assert jnp.allclose(out, ref, atol=1e-5, rtol=1e-5)

    # Second check exercising the multi-tile (pipelined, lane-dense) path.
    B2, F2 = 1024, 256
    x2 = jax.random.normal(k_x2, (B2, F2), dtype=jnp.float32)
    bound2 = 1.0 / (F2 ** 0.5)
    w2 = jax.random.uniform(
        k_w2, (1, F2), minval=-bound2, maxval=bound2, dtype=jnp.float32
    )
    out2 = svm_forward(x2, w2)
    jax.block_until_ready(out2)
    ref2 = x2 @ w2.T
    assert out2.shape == (B2, 1)
    assert jnp.allclose(out2, ref2, atol=1e-4, rtol=1e-4)

    print("KERNEL_OK")
</pallas_src>

<mosaic_0001>
module attributes {stable_mosaic.version = 11 : i64} {
  func.func @_svm_kernel(%arg0: i32, %arg1: memref<8x128xf32, #tpu.memory_space<vmem>>, %arg2: memref<1x128xf32, #tpu.memory_space<vmem>>, %arg3: memref<1x8xf32, #tpu.memory_space<vmem>>) attributes {dimension_semantics = [#tpu.dimension_semantics<parallel>], iteration_bounds = array<i64: 1>, scalar_prefetch = 0 : i64, scratch_operands = 0 : i64, tpu.core_type = #tpu.core_type<tc>, window_params = [{transform_indices = @transform_0, window_bounds = array<i64: 8, 128>}, {pipeline_mode = #tpu.pipeline_mode<synchronous>, transform_indices = @transform_1, window_bounds = array<i64: 1, 128>}, {transform_indices = @transform_2, window_bounds = array<i64: 1, 8>}]} {
    %c0 = arith.constant 0 : index
    %c0_0 = arith.constant 0 : index
    %0 = vector.load %arg2[%c0, %c0_0] : memref<1x128xf32, #tpu.memory_space<vmem>>, vector<1x128xf32>
    %c0_1 = arith.constant 0 : index
    %c0_2 = arith.constant 0 : index
    %1 = vector.load %arg1[%c0_1, %c0_2] : memref<8x128xf32, #tpu.memory_space<vmem>>, vector<8x128xf32>
    %cst = arith.constant dense<0.000000e+00> : vector<1x8xf32>
    %2 = tpu.matmul %0, %1, %cst {dimension_numbers = #tpu.dot_dimension_numbers<[1], [1], [0], [0], [0, 0, 1, 0], [], []>} : vector<1x128xf32>, vector<8x128xf32>, vector<1x8xf32> -> vector<1x8xf32>
    %c0_3 = arith.constant 0 : index
    %c0_4 = arith.constant 0 : index
    %3 = vector.load %arg3[%c0_3, %c0_4] : memref<1x8xf32, #tpu.memory_space<vmem>>, vector<1x8xf32>
    tpu.vector_store %arg3[%c0_3, %c0_4], %2 {strides = array<i32>} : memref<1x8xf32, #tpu.memory_space<vmem>>, vector<1x8xf32>,
    return
  }
  func.func @transform_0(%arg0: i32) -> (i32, i32) {
    %c0_i32 = arith.constant 0 : i32
    %c0_i32_0 = arith.constant 0 : i32
    return %arg0, %c0_i32 : i32, i32
  }
  func.func @transform_1(%arg0: i32) -> (i32, i32) {
    %c0_i32 = arith.constant 0 : i32
    %c0_i32_0 = arith.constant 0 : i32
    %c0_i32_1 = arith.constant 0 : i32
    return %c0_i32, %c0_i32_0 : i32, i32
  }
  func.func @transform_2(%arg0: i32) -> (i32, i32) {
    %c0_i32 = arith.constant 0 : i32
    %c0_i32_0 = arith.constant 0 : i32
    return %c0_i32, %arg0 : i32, i32
  }
}

</mosaic_0001>

<llo_original>
// kernel: tpu_custom_call.1
$region0: #{tpu_custom_call.1}
  #allocation0 [shape = 'u32[]', space=smem, size = 0x4, offset = 0x4, fixed_abs, tag = 'smem constant byte address 0x4 - core index']
  #allocation1 [shape = 'u32[72,128]{1,0:T(1,128)}', space=vmem, size = 0x9000, scoped, tag = 'internal scratch']
  %s0 = inlined_call_operand.hbm [shape: f32[8,128], index: 0, kind: input, shape index: {}]
  %s1 = inlined_call_operand.hbm [shape: f32[1,128], index: 1, kind: input, shape index: {}]
  %s2 = inlined_call_operand.hbm [shape: f32[1,8], index: 2, kind: output, shape index: {}]
  %s3 = sld [smem:[#allocation0]]
  $region26: #{tpu_custom_call.1} parent=0
    _
  %s5 = ssub.s32 1, %s3
  %s6 = scalar_select 0, %s5, %s3
  $region1: #{tpu_custom_call.1} parent=0
    #allocation2 [shape = 'u8[4096]{0}', space=vmem, size = 0x1000, scoped, tag = 'input window, operand 0, single buffered']
    #allocation3 [shape = 's32[1]{0}', space=sflag, size = 0x4, scoped, tag = 'scoped memory for tpu_custom_call.1']
    #allocation4 [shape = 's32[1]{0}', space=sflag, size = 0x4, scoped, tag = 'scoped memory for tpu_custom_call.1']
    #allocation5 [shape = 'u8[512]{0}', space=vmem, size = 0x400, scoped, tag = 'input window, operand 1, single buffered']
    #allocation6 [shape = 's32[1]{0}', space=sflag, size = 0x4, scoped, tag = 'scoped memory for tpu_custom_call.1']
    #allocation7 [shape = 'u8[512]{0}', space=vmem, size = 0x400, scoped, tag = 'output window, operand 0, single buffered']
    %7 = vsyncpa [#allocation3], 0
    %8 = vsyncpa [#allocation6], 0
    %9 = vsyncpa [#allocation4], 0
    // Predicated region
    $region2: #{tpu_custom_call.1} parent=1 // pred_check
      _
    $region3: #{tpu_custom_call.1} parent=1 // pred_check_branch
      %11 = sbr.rel (0) target = $region5
    $region4: #{tpu_custom_call.1} parent=1 // pred_region
      %13 = vsyncadd [#allocation3], 0
      %s15 = sshll.u32 %s0, 4
      %s16 = int_to_ptr.hbm [resolvable:$true] %s15
      %s17 = sshll.u32 [#allocation2], 4
      %s18 = int_to_ptr.vmem [resolvable:$true] %s17
      %20 = dma.hbm_to_vmem [thread:$0]  %s16, 128, %s18, [#allocation3]
    $region5: #{tpu_custom_call.1} parent=1 // pred_fallthru
      _
    // Predicated region
    $region6: #{tpu_custom_call.1} parent=1 // pred_check
      _
    $region7: #{tpu_custom_call.1} parent=1 // pred_check_branch
      %22 = sbr.rel (0) target = $region9
    $region8: #{tpu_custom_call.1} parent=1 // pred_region
      %24 = vsyncadd [#allocation6], 0
      %s26 = sshll.u32 %s1, 4
      %s27 = int_to_ptr.hbm [resolvable:$true] %s26
      %s28 = sshll.u32 [#allocation5], 4
      %s29 = int_to_ptr.vmem [resolvable:$true] %s28
      %31 = dma.hbm_to_vmem [thread:$0]  %s27, 16, %s29, [#allocation6]
    $region9: #{tpu_custom_call.1} parent=1 // pred_fallthru
      _
    // Predicated region
    $region10: #{tpu_custom_call.1} parent=1 // pred_check
      _
    $region11: #{tpu_custom_call.1} parent=1 // pred_check_branch
      %33 = sbr.rel (0) target = $region13
    $region12: #{tpu_custom_call.1} parent=1 // pred_region
      %35 = dma.done [#allocation3], 128
    $region13: #{tpu_custom_call.1} parent=1 // pred_fallthru
      _
    // Predicated region
    $region14: #{tpu_custom_call.1} parent=1 // pred_check
      _
    $region15: #{tpu_custom_call.1} parent=1 // pred_check_branch
      %37 = sbr.rel (0) target = $region17
    $region16: #{tpu_custom_call.1} parent=1 // pred_region
      %39 = dma.done [#allocation6], 16
    $region17: #{tpu_custom_call.1} parent=1 // pred_fallthru
      _
    %v40 = vld [vmem:[#allocation5] sm:$0x1]
    %v41 = vld [vmem:[#allocation2] sm:$0xff]
    %42 = vmatpush.xpose.msra.mxu0 0.0
    %43 = vmatpush.xpose.msra.mxu0 0.0
    %44 = vmatpush.xpose.msra.mxu0 0.0
    %45 = vmatpush.xpose.msra.mxu0 0.0
    %46 = vmatpush.xpose.msra.mxu0 0.0
    %47 = vmatpush.xpose.msra.mxu0 0.0
    %48 = vmatpush.xpose.msra.mxu0 0.0
    %49 = vmatpush.xpose.msra.mxu0 0.0
    %50 = vmatpush.xpose.msra.mxu0 0.0
    %51 = vmatpush.xpose.msra.mxu0 0.0
    %52 = vmatpush.xpose.msra.mxu0 0.0
    %53 = vmatpush.xpose.msra.mxu0 0.0
    %54 = vmatpush.xpose.msra.mxu0 0.0
    %55 = vmatpush.xpose.msra.mxu0 0.0
    %56 = vmatpush.xpose.msra.mxu0 0.0
    %57 = vmatpush.xpose.msra.mxu0 %v41
    %58 = vmatmul.f32.gmra.mxu0 %v40
    %v59 = vpop.f32.mrf.mxu0
    %v60 = vadd.f32 0.0, %v59
    %61 = vdwg.mxu0
    %vm62 = vcmask 57344
    %63 = vst.msk [vmem:[#allocation7] sm:$0x1] %vm62, %v60
    // Predicated region
    $region18: #{tpu_custom_call.1} parent=1 // pred_check
      _
    $region19: #{tpu_custom_call.1} parent=1 // pred_check_branch
      %65 = sbr.rel (0) target = $region21
    $region20: #{tpu_custom_call.1} parent=1 // pred_region
      %67 = vsyncadd [#allocation4], 0
      %s69 = sshll.u32 [#allocation7], 4
      %s70 = int_to_ptr.vmem [resolvable:$true] %s69
      %s71 = sshll.u32 %s2, 4
      %s72 = int_to_ptr.hbm [resolvable:$true] %s71
      %74 = dma.vmem_to_hbm [thread:$0]  %s70, 16, %s72, [#allocation4]
    $region21: #{tpu_custom_call.1} parent=1 // pred_fallthru
      _
    // Predicated region
    $region22: #{tpu_custom_call.1} parent=1 // pred_check
      _
    $region23: #{tpu_custom_call.1} parent=1 // pred_check_branch
      %76 = sbr.rel (0) target = $region25
    $region24: #{tpu_custom_call.1} parent=1 // pred_region
      %78 = dma.done [#allocation4], 16
    $region25: #{tpu_custom_call.1} parent=1 // pred_fallthru
      _
    %79 = vsyncpa [#allocation3], 1
    %80 = vsyncpa [#allocation6], 1
    %81 = vsyncpa [#allocation4], 1

</llo_original>
